<compile_context>
chip_gen: v7x
topology: tpu7x:2x2x1
jax: 0.10.0
libtpu: 0.0.40
codegen_flags: <defaults>
</compile_context>

<pallas_src>
import jax
import jax.numpy as jnp
from jax.experimental import pallas as pl
from jax.experimental.pallas import tpu as pltpu

_LANE = 128


def _copy_kernel(src_ref, out_ref):
    # The "gather by arange" is an identity copy of the current tile.
    out_ref[...] = src_ref[...]


def random_positional_embedding(x, emb_weight, *, vmem_budget_bytes=8 << 20):
    """Equivalent of RandomPositionalEmbedding.forward(x).

    Only x.shape[1] is consumed (matching the PyTorch module).
    Returns emb_weight[arange(seq_len)] of shape (seq_len, dim).
    """
    seq_len = x.shape[1]
    max_seq_len, dim = emb_weight.shape
    assert seq_len <= max_seq_len

    dtype = emb_weight.dtype
    itemsize = jnp.dtype(dtype).itemsize
    total = seq_len * dim

    # Zero-copy layout plumbing in the wrapper; the Pallas kernel does the move.
    if total % _LANE == 0:
        # Lane-dense flattened view: last dim = 128 -> unmasked vector stores.
        src = emb_weight.reshape(-1)[:total].reshape(total // _LANE, _LANE)
    else:
        # Fallback: keep (seq_len, dim) rows (lane-sparse but correct).
        src = emb_weight[:seq_len]

    n_rows, width = src.shape

    # Packed-sublane minimum rows per tile: 8 (f32), 16 (bf16), 32 (int8/fp8).
    sub = max(8, 32 // itemsize)

    # Largest row tile whose double-buffered in+out (~4 buffers) fits the budget.
    # 8 MiB working set stays well inside the scoped-VMEM default on v5e (16 MiB)
    # and v6e/v7x (32 MiB), so no vmem_limit_bytes override is needed.
    max_tile = max(sub, vmem_budget_bytes // (4 * width * itemsize))
    if n_rows <= max_tile:
        tile_rows = n_rows  # single block: whole slab in one grid step
    else:
        tile_rows = (max_tile // sub) * sub

    grid = (pl.cdiv(n_rows, tile_rows),)

    out = pl.pallas_call(
        _copy_kernel,
        out_shape=jax.ShapeDtypeStruct((n_rows, width), dtype),
        grid=grid,
        in_specs=[pl.BlockSpec((tile_rows, width), lambda i: (i, 0))],
        out_specs=pl.BlockSpec((tile_rows, width), lambda i: (i, 0)),
        compiler_params=pltpu.CompilerParams(
            dimension_semantics=("parallel",),
        ),
    )(src)

    return out.reshape(seq_len, dim)


if __name__ == "__main__":
    key = jax.random.PRNGKey(0)
    k_emb, k_x, k_emb2, k_x2 = jax.random.split(key, 4)

    # --- Case 1: module hyper-params from the spec (small, lane-dense path). ---
    dim, max_seq_len = 32, 16
    emb_weight = jax.random.normal(k_emb, (max_seq_len, dim), dtype=jnp.float32)
    x = jax.random.normal(k_x, (2, 8, 32), dtype=jnp.float32)  # only x.shape[1] matters

    out = jax.block_until_ready(random_positional_embedding(x, emb_weight))
    ref = emb_weight[: x.shape[1], :]
    assert out.shape == (x.shape[1], dim)
    assert out.dtype == emb_weight.dtype
    assert jnp.allclose(out, ref), "mismatch vs reference embedding lookup (case 1)"

    # --- Case 2: ragged / non-128-divisible shapes exercise the fallback path. ---
    dim2, max_seq_len2, seq2 = 20, 11, 5
    emb_weight2 = jax.random.normal(k_emb2, (max_seq_len2, dim2), dtype=jnp.float32)
    x2 = jax.random.normal(k_x2, (2, seq2, dim2), dtype=jnp.float32)

    out2 = jax.block_until_ready(random_positional_embedding(x2, emb_weight2))
    ref2 = emb_weight2[:seq2, :]
    assert out2.shape == (seq2, dim2)
    assert jnp.allclose(out2, ref2), "mismatch vs reference embedding lookup (case 2)"

    print("KERNEL_OK")
</pallas_src>

<mosaic_0001>
module attributes {stable_mosaic.version = 11 : i64} {
  func.func @_copy_kernel(%arg0: i32, %arg1: memref<2x128xf32, #tpu.memory_space<vmem>>, %arg2: memref<2x128xf32, #tpu.memory_space<vmem>>) attributes {dimension_semantics = [#tpu.dimension_semantics<parallel>], iteration_bounds = array<i64: 1>, scalar_prefetch = 0 : i64, scratch_operands = 0 : i64, tpu.core_type = #tpu.core_type<tc>, window_params = [{transform_indices = @transform_0, window_bounds = array<i64: 2, 128>}, {transform_indices = @transform_1, window_bounds = array<i64: 2, 128>}]} {
    %c0 = arith.constant 0 : index
    %c0_0 = arith.constant 0 : index
    %0 = vector.load %arg1[%c0, %c0_0] : memref<2x128xf32, #tpu.memory_space<vmem>>, vector<2x128xf32>
    %c0_1 = arith.constant 0 : index
    %c0_2 = arith.constant 0 : index
    %1 = vector.load %arg2[%c0_1, %c0_2] : memref<2x128xf32, #tpu.memory_space<vmem>>, vector<2x128xf32>
    tpu.vector_store %arg2[%c0_1, %c0_2], %0 {strides = array<i32>} : memref<2x128xf32, #tpu.memory_space<vmem>>, vector<2x128xf32>,
    return
  }
  func.func @transform_0(%arg0: i32) -> (i32, i32) {
    %c0_i32 = arith.constant 0 : i32
    %c0_i32_0 = arith.constant 0 : i32
    return %arg0, %c0_i32 : i32, i32
  }
  func.func @transform_1(%arg0: i32) -> (i32, i32) {
    %c0_i32 = arith.constant 0 : i32
    %c0_i32_0 = arith.constant 0 : i32
    return %arg0, %c0_i32 : i32, i32
  }
}

</mosaic_0001>

<llo_original>
// kernel: tpu_custom_call.1
$region0: #{tpu_custom_call.1}
  #allocation0 [shape = 'u32[]', space=smem, size = 0x4, offset = 0x4, fixed_abs, tag = 'smem constant byte address 0x4 - core index']
  #allocation1 [shape = 'u32[144,128]{1,0:T(1,128)}', space=vmem, size = 0x12000, scoped, tag = 'internal scratch']
  %s0 = inlined_call_operand.hbm [shape: f32[2,128], index: 0, kind: input, shape index: {}]
  %s1 = inlined_call_operand.hbm [shape: f32[2,128], index: 1, kind: output, shape index: {}]
  %s2 = sld [smem:[#allocation0]]
  $region18: #{tpu_custom_call.1} parent=0
    _
  %s4 = ssub.s32 1, %s2
  %s5 = scalar_select 0, %s4, %s2
  $region1: #{tpu_custom_call.1} parent=0
    #allocation2 [shape = 'u8[1024]{0}', space=vmem, size = 0x400, scoped, tag = 'input window, operand 0, single buffered']
    #allocation3 [shape = 's32[1]{0}', space=sflag, size = 0x4, scoped, tag = 'scoped memory for tpu_custom_call.1']
    #allocation4 [shape = 's32[1]{0}', space=sflag, size = 0x4, scoped, tag = 'scoped memory for tpu_custom_call.1']
    #allocation5 [shape = 'u8[1024]{0}', space=vmem, size = 0x400, scoped, tag = 'output window, operand 0, single buffered']
    %6 = vsyncpa [#allocation3], 0
    %7 = vsyncpa [#allocation4], 0
    // Predicated region
    $region2: #{tpu_custom_call.1} parent=1 // pred_check
      _
    $region3: #{tpu_custom_call.1} parent=1 // pred_check_branch
      %9 = sbr.rel (0) target = $region5
    $region4: #{tpu_custom_call.1} parent=1 // pred_region
      %s11 = ssub.s32 32, 32
      %12 = vsyncadd [#allocation3], %s11
      %s14 = sshll.u32 [#allocation2], 4
      %s15 = int_to_ptr.vmem [resolvable:$true] %s14
      %17 = dma.hbm_to_vmem [thread:$0]  %s0, 32, %s15, [#allocation3]
    $region5: #{tpu_custom_call.1} parent=1 // pred_fallthru
      _
    // Predicated region
    $region6: #{tpu_custom_call.1} parent=1 // pred_check
      _
    $region7: #{tpu_custom_call.1} parent=1 // pred_check_branch
      %19 = sbr.rel (0) target = $region9
    $region8: #{tpu_custom_call.1} parent=1 // pred_region
      %20 = dma.done [#allocation3], 32
    $region9: #{tpu_custom_call.1} parent=1 // pred_fallthru
      _
    %v21 = vld [vmem:[#allocation2] sm:$0x3]
    %22 = vst [vmem:[#allocation5] sm:$0x3] %v21
    // Predicated region
    $region10: #{tpu_custom_call.1} parent=1 // pred_check
      _
    $region11: #{tpu_custom_call.1} parent=1 // pred_check_branch
      %24 = sbr.rel (0) target = $region13
    $region12: #{tpu_custom_call.1} parent=1 // pred_region
      %s26 = ssub.s32 32, 32
      %27 = vsyncadd [#allocation4], %s26
      %s29 = sshll.u32 [#allocation5], 4
      %s30 = int_to_ptr.vmem [resolvable:$true] %s29
      %32 = dma.vmem_to_hbm [thread:$0]  %s30, 32, %s1, [#allocation4]
    $region13: #{tpu_custom_call.1} parent=1 // pred_fallthru
      _
    // Predicated region
    $region14: #{tpu_custom_call.1} parent=1 // pred_check
      _
    $region15: #{tpu_custom_call.1} parent=1 // pred_check_branch
      %34 = sbr.rel (0) target = $region17
    $region16: #{tpu_custom_call.1} parent=1 // pred_region
      %35 = dma.done [#allocation4], 32
    $region17: #{tpu_custom_call.1} parent=1 // pred_fallthru
      _
    %36 = vsyncpa [#allocation3], 1
    %37 = vsyncpa [#allocation4], 1

</llo_original>
